<compile_context>
chip_gen: v7x
topology: tpu7x:2x2x1
jax: 0.10.0
libtpu: 0.0.40
codegen_flags: <defaults>
</compile_context>

<pallas_src>
import jax
import jax.numpy as jnp
from jax.experimental import pallas as pl
from jax.experimental.pallas import tpu as pltpu

INPUT_DIM = 561
HID1 = 250
HID2 = 100
OUTPUT_DIM = 6

# Lane-padded (multiple-of-128) stored sizes for the feature axes.
H1_PAD = 256
H2_PAD = 128
OUT_PAD = 128

DEFAULT_TILE_B = 256  # fills >=256 MXU rows per step on v6e/v7x


def _round_up(n, m):
    return ((n + m - 1) // m) * m


def har_mlp_kernel(x_ref, w1_ref, b1_ref, w2_ref, b2_ref, w3_ref, b3_ref, o_ref):
    # Layer 1: Linear(561 -> 250[pad 256]) + ReLU.  bf16 MXU inputs, f32 acc.
    h1 = jnp.dot(x_ref[...], w1_ref[...], preferred_element_type=jnp.float32)
    h1 = jnp.maximum(h1 + b1_ref[...], 0.0)            # f32 epilogue (v5e VPU has no bf16)
    # Layer 2: Linear(250 -> 100[pad 128]) + ReLU.
    h2 = jnp.dot(h1.astype(jnp.bfloat16), w2_ref[...],
                 preferred_element_type=jnp.float32)
    h2 = jnp.maximum(h2 + b2_ref[...], 0.0)
    # Layer 3: Linear(100 -> 6[pad 128]), no activation. Lane-dense store.
    y = jnp.dot(h2.astype(jnp.bfloat16), w3_ref[...],
                preferred_element_type=jnp.float32)
    o_ref[...] = (y + b3_ref[...]).astype(o_ref.dtype)


def har_mlp_forward(x, params, tile_b=DEFAULT_TILE_B):
    """x: (B, INPUT_DIM) float32; params: dict of padded bf16 weights / f32 biases."""
    batch = x.shape[0]
    x = x.reshape(batch, -1).astype(jnp.bfloat16)       # mirrors x.view(batch_size, -1)

    w1, b1 = params["w1"], params["b1"]
    w2, b2 = params["w2"], params["b2"]
    w3, b3 = params["w3"], params["b3"]

    # Batch tiling: tile must be a multiple of 8 sublanes; pad batch to a
    # whole number of tiles so every grid step is full.
    tile_b = min(tile_b, _round_up(max(batch, 1), 8))
    b_pad = _round_up(batch, tile_b)
    if b_pad != batch:
        x = jnp.pad(x, ((0, b_pad - batch), (0, 0)))
    grid = (b_pad // tile_b,)

    resident = lambda shape: pl.BlockSpec(shape, lambda i: (0, 0))  # weights: DMA once

    weight_bytes = (w1.size + w2.size + w3.size) * 2 + (b1.size + b2.size + b3.size) * 4
    io_bytes = x.size * 2 + b_pad * OUT_PAD * 4
    flops = 2 * b_pad * (INPUT_DIM * HID1 + HID1 * HID2 + HID2 * OUTPUT_DIM)

    # Actual footprint: resident weights + double-buffered x / out tiles (+ headroom).
    vmem_needed = (weight_bytes
                   + 2 * tile_b * INPUT_DIM * 2
                   + 2 * tile_b * OUT_PAD * 4)
    vmem_limit = max(8 << 20, 4 * vmem_needed)           # few MiB; << 64 MiB v7x VMEM

    out = pl.pallas_call(
        har_mlp_kernel,
        out_shape=jax.ShapeDtypeStruct((b_pad, OUT_PAD), jnp.float32),
        grid=grid,
        in_specs=[
            pl.BlockSpec((tile_b, INPUT_DIM), lambda i: (i, 0)),
            resident(w1.shape), resident(b1.shape),
            resident(w2.shape), resident(b2.shape),
            resident(w3.shape), resident(b3.shape),
        ],
        out_specs=pl.BlockSpec((tile_b, OUT_PAD), lambda i: (i, 0)),
        compiler_params=pltpu.CompilerParams(
            dimension_semantics=("parallel",),            # 2 TCs on v7x; no-op on v5e/v6e
            vmem_limit_bytes=int(vmem_limit),
        ),
        cost_estimate=pl.CostEstimate(
            flops=flops, transcendentals=0,
            bytes_accessed=weight_bytes + io_bytes),
    )(x, w1, b1, w2, b2, w3, b3)

    return out[:batch, :OUTPUT_DIM]


def init_params(key):
    """PyTorch nn.Linear-style init (U(-1/sqrt(in), 1/sqrt(in))), stored transposed
    as (in, out), zero-padded to lane-friendly sizes; weights bf16, biases f32."""
    def linear(key, fan_in, fan_out, in_pad, out_pad):
        kw, kb = jax.random.split(key)
        bound = 1.0 / jnp.sqrt(fan_in)
        w = jax.random.uniform(kw, (fan_in, fan_out), jnp.float32, -bound, bound)
        b = jax.random.uniform(kb, (1, fan_out), jnp.float32, -bound, bound)
        w = jnp.pad(w, ((0, in_pad - fan_in), (0, out_pad - fan_out)))
        b = jnp.pad(b, ((0, 0), (0, out_pad - fan_out)))
        return w.astype(jnp.bfloat16), b

    k1, k2, k3 = jax.random.split(key, 3)
    w1, b1 = linear(k1, INPUT_DIM, HID1, INPUT_DIM, H1_PAD)  # K=561 left unpadded
    w2, b2 = linear(k2, HID1, HID2, H1_PAD, H2_PAD)
    w3, b3 = linear(k3, HID2, OUTPUT_DIM, H2_PAD, OUT_PAD)
    return {"w1": w1, "b1": b1, "w2": w2, "b2": b2, "w3": w3, "b3": b3}


def reference_forward(x, params):
    """Pure-JAX reference using the same bf16 weights / f32 accumulation."""
    x = x.reshape(x.shape[0], -1).astype(jnp.bfloat16)
    h1 = jnp.maximum(
        jnp.dot(x, params["w1"], preferred_element_type=jnp.float32) + params["b1"], 0.0)
    h2 = jnp.maximum(
        jnp.dot(h1.astype(jnp.bfloat16), params["w2"],
                preferred_element_type=jnp.float32) + params["b2"], 0.0)
    y = jnp.dot(h2.astype(jnp.bfloat16), params["w3"],
                preferred_element_type=jnp.float32) + params["b3"]
    return y[:, :OUTPUT_DIM]


if __name__ == "__main__":
    key = jax.random.PRNGKey(0)
    kx, kp = jax.random.split(key)

    batch = 4
    x = jax.random.normal(kx, (batch, INPUT_DIM), jnp.float32)
    params = init_params(kp)

    y = har_mlp_forward(x, params)
    y = jax.block_until_ready(y)

    y_ref = reference_forward(x, params)
    assert y.shape == (batch, OUTPUT_DIM)
    assert jnp.allclose(y, y_ref, atol=2e-2, rtol=2e-2), float(jnp.max(jnp.abs(y - y_ref)))

    print("KERNEL_OK")
</pallas_src>

<mosaic_0001>
module attributes {stable_mosaic.version = 11 : i64} {
  func.func @har_mlp_kernel(%arg0: i32, %arg1: memref<8x561xbf16, #tpu.memory_space<vmem>>, %arg2: memref<561x256xbf16, #tpu.memory_space<vmem>>, %arg3: memref<1x256xf32, #tpu.memory_space<vmem>>, %arg4: memref<256x128xbf16, #tpu.memory_space<vmem>>, %arg5: memref<1x128xf32, #tpu.memory_space<vmem>>, %arg6: memref<128x128xbf16, #tpu.memory_space<vmem>>, %arg7: memref<1x128xf32, #tpu.memory_space<vmem>>, %arg8: memref<8x128xf32, #tpu.memory_space<vmem>>) attributes {dimension_semantics = [#tpu.dimension_semantics<parallel>], iteration_bounds = array<i64: 1>, scalar_prefetch = 0 : i64, scratch_operands = 0 : i64, tpu.core_type = #tpu.core_type<tc>, window_params = [{transform_indices = @transform_0, window_bounds = array<i64: 8, 561>}, {pipeline_mode = #tpu.pipeline_mode<synchronous>, transform_indices = @transform_1, window_bounds = array<i64: 561, 256>}, {pipeline_mode = #tpu.pipeline_mode<synchronous>, transform_indices = @transform_2, window_bounds = array<i64: 1, 256>}, {pipeline_mode = #tpu.pipeline_mode<synchronous>, transform_indices = @transform_3, window_bounds = array<i64: 256, 128>}, {pipeline_mode = #tpu.pipeline_mode<synchronous>, transform_indices = @transform_4, window_bounds = array<i64: 1, 128>}, {pipeline_mode = #tpu.pipeline_mode<synchronous>, transform_indices = @transform_5, window_bounds = array<i64: 128, 128>}, {pipeline_mode = #tpu.pipeline_mode<synchronous>, transform_indices = @transform_6, window_bounds = array<i64: 1, 128>}, {transform_indices = @transform_7, window_bounds = array<i64: 8, 128>}]} {
    %c0 = arith.constant 0 : index
    %c0_0 = arith.constant 0 : index
    %0 = vector.load %arg1[%c0, %c0_0] : memref<8x561xbf16, #tpu.memory_space<vmem>>, vector<8x561xbf16>
    %c0_1 = arith.constant 0 : index
    %c0_2 = arith.constant 0 : index
    %1 = vector.load %arg2[%c0_1, %c0_2] : memref<561x256xbf16, #tpu.memory_space<vmem>>, vector<561x256xbf16>
    %cst = arith.constant dense<0.000000e+00> : vector<8x256xf32>
    %2 = tpu.matmul %0, %1, %cst {dimension_numbers = #tpu.dot_dimension_numbers<[1], [0], [0], [1], [0, 0, 1, 1], [], []>} : vector<8x561xbf16>, vector<561x256xbf16>, vector<8x256xf32> -> vector<8x256xf32>
    %c0_3 = arith.constant 0 : index
    %c0_4 = arith.constant 0 : index
    %3 = vector.load %arg3[%c0_3, %c0_4] : memref<1x256xf32, #tpu.memory_space<vmem>>, vector<1x256xf32>
    %4 = vector.broadcast %3 : vector<1x256xf32> to vector<8x256xf32>
    %5 = arith.addf %2, %4 : vector<8x256xf32>
    %cst_5 = arith.constant 0.000000e+00 : f32
    %6 = vector.broadcast %cst_5 : f32 to vector<8x256xf32>
    %7 = arith.maximumf %5, %6 : vector<8x256xf32>
    %8 = arith.truncf %7 : vector<8x256xf32> to vector<8x256xbf16>
    %c0_6 = arith.constant 0 : index
    %c0_7 = arith.constant 0 : index
    %9 = vector.load %arg4[%c0_6, %c0_7] : memref<256x128xbf16, #tpu.memory_space<vmem>>, vector<256x128xbf16>
    %cst_8 = arith.constant dense<0.000000e+00> : vector<8x128xf32>
    %10 = tpu.matmul %8, %9, %cst_8 {dimension_numbers = #tpu.dot_dimension_numbers<[1], [0], [0], [1], [0, 0, 1, 1], [], []>} : vector<8x256xbf16>, vector<256x128xbf16>, vector<8x128xf32> -> vector<8x128xf32>
    %c0_9 = arith.constant 0 : index
    %c0_10 = arith.constant 0 : index
    %11 = vector.load %arg5[%c0_9, %c0_10] : memref<1x128xf32, #tpu.memory_space<vmem>>, vector<1x128xf32>
    %12 = vector.broadcast %11 : vector<1x128xf32> to vector<8x128xf32>
    %13 = arith.addf %10, %12 : vector<8x128xf32>
    %cst_11 = arith.constant 0.000000e+00 : f32
    %14 = vector.broadcast %cst_11 : f32 to vector<8x128xf32>
    %15 = arith.maximumf %13, %14 : vector<8x128xf32>
    %16 = arith.truncf %15 : vector<8x128xf32> to vector<8x128xbf16>
    %c0_12 = arith.constant 0 : index
    %c0_13 = arith.constant 0 : index
    %17 = vector.load %arg6[%c0_12, %c0_13] : memref<128x128xbf16, #tpu.memory_space<vmem>>, vector<128x128xbf16>
    %cst_14 = arith.constant dense<0.000000e+00> : vector<8x128xf32>
    %18 = tpu.matmul %16, %17, %cst_14 {dimension_numbers = #tpu.dot_dimension_numbers<[1], [0], [0], [1], [0, 0, 1, 1], [], []>} : vector<8x128xbf16>, vector<128x128xbf16>, vector<8x128xf32> -> vector<8x128xf32>
    %c0_15 = arith.constant 0 : index
    %c0_16 = arith.constant 0 : index
    %19 = vector.load %arg7[%c0_15, %c0_16] : memref<1x128xf32, #tpu.memory_space<vmem>>, vector<1x128xf32>
    %20 = vector.broadcast %19 : vector<1x128xf32> to vector<8x128xf32>
    %21 = arith.addf %18, %20 : vector<8x128xf32>
    %c0_17 = arith.constant 0 : index
    %c0_18 = arith.constant 0 : index
    %22 = vector.load %arg8[%c0_17, %c0_18] : memref<8x128xf32, #tpu.memory_space<vmem>>, vector<8x128xf32>
    tpu.vector_store %arg8[%c0_17, %c0_18], %21 {strides = array<i32>} : memref<8x128xf32, #tpu.memory_space<vmem>>, vector<8x128xf32>,
    return
  }
  func.func @transform_0(%arg0: i32) -> (i32, i32) {
    %c0_i32 = arith.constant 0 : i32
    %c0_i32_0 = arith.constant 0 : i32
    return %arg0, %c0_i32 : i32, i32
  }
  func.func @transform_1(%arg0: i32) -> (i32, i32) {
    %c0_i32 = arith.constant 0 : i32
    %c0_i32_0 = arith.constant 0 : i32
    %c0_i32_1 = arith.constant 0 : i32
    return %c0_i32, %c0_i32_0 : i32, i32
  }
  func.func @transform_2(%arg0: i32) -> (i32, i32) {
    %c0_i32 = arith.constant 0 : i32
    %c0_i32_0 = arith.constant 0 : i32
    %c0_i32_1 = arith.constant 0 : i32
    return %c0_i32, %c0_i32_0 : i32, i32
  }
  func.func @transform_3(%arg0: i32) -> (i32, i32) {
    %c0_i32 = arith.constant 0 : i32
    %c0_i32_0 = arith.constant 0 : i32
    %c0_i32_1 = arith.constant 0 : i32
    return %c0_i32, %c0_i32_0 : i32, i32
  }
  func.func @transform_4(%arg0: i32) -> (i32, i32) {
    %c0_i32 = arith.constant 0 : i32
    %c0_i32_0 = arith.constant 0 : i32
    %c0_i32_1 = arith.constant 0 : i32
    return %c0_i32, %c0_i32_0 : i32, i32
  }
  func.func @transform_5(%arg0: i32) -> (i32, i32) {
    %c0_i32 = arith.constant 0 : i32
    %c0_i32_0 = arith.constant 0 : i32
    %c0_i32_1 = arith.constant 0 : i32
    return %c0_i32, %c0_i32_0 : i32, i32
  }
  func.func @transform_6(%arg0: i32) -> (i32, i32) {
    %c0_i32 = arith.constant 0 : i32
    %c0_i32_0 = arith.constant 0 : i32
    %c0_i32_1 = arith.constant 0 : i32
    return %c0_i32, %c0_i32_0 : i32, i32
  }
  func.func @transform_7(%arg0: i32) -> (i32, i32) {
    %c0_i32 = arith.constant 0 : i32
    %c0_i32_0 = arith.constant 0 : i32
    return %arg0, %c0_i32 : i32, i32
  }
}

</mosaic_0001>

<llo_original>
// kernel: tpu_custom_call.1
$region0: #{tpu_custom_call.1}
  #allocation0 [shape = 'u32[]', space=smem, size = 0x4, offset = 0x4, fixed_abs, tag = 'smem constant byte address 0x4 - core index']
  #allocation1 [shape = 'u32[144,128]{1,0:T(1,128)}', space=vmem, size = 0x12000, scoped, tag = 'internal scratch']
  %s0 = inlined_call_operand.hbm [shape: bf16[8,561], index: 0, kind: input, shape index: {}]
  %s1 = inlined_call_operand.hbm [shape: bf16[561,256], index: 1, kind: input, shape index: {}]
  %s2 = inlined_call_operand.vmem [shape: f32[1,256], index: 2, kind: input, shape index: {}]
  %s3 = inlined_call_operand.hbm [shape: bf16[256,128], index: 3, kind: input, shape index: {}]
  %s4 = inlined_call_operand.vmem [shape: f32[1,128], index: 4, kind: input, shape index: {}]
  %s5 = inlined_call_operand.hbm [shape: bf16[128,128], index: 5, kind: input, shape index: {}]
  %s6 = inlined_call_operand.vmem [shape: f32[1,128], index: 6, kind: input, shape index: {}]
  %s7 = inlined_call_operand.hbm [shape: f32[8,128], index: 7, kind: output, shape index: {}]
  %s8 = sld [smem:[#allocation0]]
  $region54: #{tpu_custom_call.1} parent=0
    _
  %s10 = ssub.s32 1, %s8
  %s11 = scalar_select 0, %s10, %s8
  $region1: #{tpu_custom_call.1} parent=0
    #allocation2 [shape = 'u8[10240]{0}', space=vmem, size = 0x2800, scoped, tag = 'input window, operand 0, single buffered']
    #allocation3 [shape = 's32[1]{0}', space=sflag, size = 0x4, scoped, tag = 'scoped memory for tpu_custom_call.1']
    #allocation4 [shape = 's32[1]{0}', space=sflag, size = 0x4, scoped, tag = 'scoped memory for tpu_custom_call.1']
    #allocation5 [shape = 'u8[290816]{0}', space=vmem, size = 0x47000, scoped, tag = 'input window, operand 1, single buffered']
    #allocation6 [shape = 's32[1]{0}', space=sflag, size = 0x4, scoped, tag = 'scoped memory for tpu_custom_call.1']
    #allocation7 [shape = 'u8[65536]{0}', space=vmem, size = 0x10000, scoped, tag = 'input window, operand 3, single buffered']
    #allocation8 [shape = 'u8[32768]{0}', space=vmem, size = 0x8000, scoped, tag = 'input window, operand 5, single buffered']
    #allocation9 [shape = 's32[1]{0}', space=sflag, size = 0x4, scoped, tag = 'scoped memory for tpu_custom_call.1']
    #allocation10 [shape = 'u8[4096]{0}', space=vmem, size = 0x1000, scoped, tag = 'output window, operand 0, single buffered']
    %12 = vsyncpa [#allocation3], 0
    %13 = vsyncpa [#allocation6], 0
    %14 = vsyncpa [#allocation9], 0
    %15 = vsyncpa [#allocation4], 0
    // Predicated region
    $region2: #{tpu_custom_call.1} parent=1 // pred_check
      _
    $region3: #{tpu_custom_call.1} parent=1 // pred_check_branch
      %17 = sbr.rel (0) target = $region5
    $region4: #{tpu_custom_call.1} parent=1 // pred_region
      %s19 = ssub.s32 320, 320
      %20 = vsyncadd [#allocation3], %s19
      %s22 = sshll.u32 [#allocation2], 4
      %s23 = int_to_ptr.vmem [resolvable:$true] %s22
      %25 = dma.hbm_to_vmem [thread:$0]  %s0, 320, %s23, [#allocation3]
    $region5: #{tpu_custom_call.1} parent=1 // pred_fallthru
      _
    // Predicated region
    $region6: #{tpu_custom_call.1} parent=1 // pred_check
      _
    $region7: #{tpu_custom_call.1} parent=1 // pred_check_branch
      %27 = sbr.rel (0) target = $region9
    $region8: #{tpu_custom_call.1} parent=1 // pred_region
      %s29 = ssub.s32 9088, 9088
      %30 = vsyncadd [#allocation6], %s29
      %s31 = sshll.u32 [#allocation5], 4
      %s32 = int_to_ptr.vmem [resolvable:$true] %s31
      %37 = dma.hbm_to_vmem [thread:$0]  %s1, 9088, %s32, [#allocation6], 128, 128, 8
    $region9: #{tpu_custom_call.1} parent=1 // pred_fallthru
      _
    // Predicated region
    $region10: #{tpu_custom_call.1} parent=1 // pred_check
      _
    $region11: #{tpu_custom_call.1} parent=1 // pred_check_branch
      %39 = sbr.rel (0) target = $region13
    $region12: #{tpu_custom_call.1} parent=1 // pred_region
      _
    $region13: #{tpu_custom_call.1} parent=1 // pred_fallthru
      _
    // Predicated region
    $region14: #{tpu_custom_call.1} parent=1 // pred_check
      _
    $region15: #{tpu_custom_call.1} parent=1 // pred_check_branch
      %41 = sbr.rel (0) target = $region17
    $region16: #{tpu_custom_call.1} parent=1 // pred_region
      %s43 = ssub.s32 2048, 2048
      %44 = vsyncadd [#allocation6], %s43
      %s45 = sshll.u32 [#allocation7], 4
      %s46 = int_to_ptr.vmem [resolvable:$true] %s45
      %51 = dma.hbm_to_vmem [thread:$0]  %s3, 2048, %s46, [#allocation6], 64, 64, 4
    $region17: #{tpu_custom_call.1} parent=1 // pred_fallthru
      _
    // Predicated region
    $region18: #{tpu_custom_call.1} parent=1 // pred_check
      _
    $region19: #{tpu_custom_call.1} parent=1 // pred_check_branch
      %53 = sbr.rel (0) target = $region21
    $region20: #{tpu_custom_call.1} parent=1 // pred_region
      _
    $region21: #{tpu_custom_call.1} parent=1 // pred_fallthru
      _
    // Predicated region
    $region22: #{tpu_custom_call.1} parent=1 // pred_check
      _
    $region23: #{tpu_custom_call.1} parent=1 // pred_check_branch
      %55 = sbr.rel (0) target = $region25
    $region24: #{tpu_custom_call.1} parent=1 // pred_region
      %s57 = ssub.s32 1024, 1024
      %58 = vsyncadd [#allocation9], %s57
      %s59 = sshll.u32 [#allocation8], 4
      %s60 = int_to_ptr.vmem [resolvable:$true] %s59
      %65 = dma.hbm_to_vmem [thread:$0]  %s5, 1024, %s60, [#allocation9], 64, 64, 4
    $region25: #{tpu_custom_call.1} parent=1 // pred_fallthru
      _
    // Predicated region
    $region26: #{tpu_custom_call.1} parent=1 // pred_check
      _
    $region27: #{tpu_custom_call.1} parent=1 // pred_check_branch
      %67 = sbr.rel (0) target = $region29
    $region28: #{tpu_custom_call.1} parent=1 // pred_region
      _
    $region29: #{tpu_custom_call.1} parent=1 // pred_fallthru
      _
    // Predicated region
    $region30: #{tpu_custom_call.1} parent=1 // pred_check
      _
    $region31: #{tpu_custom_call.1} parent=1 // pred_check_branch
      %69 = sbr.rel (0) target = $region33
    $region32: #{tpu_custom_call.1} parent=1 // pred_region
      %70 = dma.done [#allocation3], 320
    $region33: #{tpu_custom_call.1} parent=1 // pred_fallthru
      _
    // Predicated region
    $region34: #{tpu_custom_call.1} parent=1 // pred_check
      _
    $region35: #{tpu_custom_call.1} parent=1 // pred_check_branch
      %72 = sbr.rel (0) target = $region37
    $region36: #{tpu_custom_call.1} parent=1 // pred_region
      %73 = dma.done [#allocation6], 9088
    $region37: #{tpu_custom_call.1} parent=1 // pred_fallthru
      _
    // Predicated region
    $region38: #{tpu_custom_call.1} parent=1 // pred_check
      _
    $region39: #{tpu_custom_call.1} parent=1 // pred_check_branch
      %75 = sbr.rel (0) target = $region41
    $region40: #{tpu_custom_call.1} parent=1 // pred_region
      %76 = dma.done [#allocation6], 2048
    $region41: #{tpu_custom_call.1} parent=1 // pred_fallthru
      _
    // Predicated region
    $region42: #{tpu_custom_call.1} parent=1 // pred_check
      _
    $region43: #{tpu_custom_call.1} parent=1 // pred_check_branch
      %78 = sbr.rel (0) target = $region45
    $region44: #{tpu_custom_call.1} parent=1 // pred_region
      %79 = dma.done [#allocation9], 1024
    $region45: #{tpu_custom_call.1} parent=1 // pred_fallthru
      _
    %v81 = vld [vmem:[#allocation2] sm:$0xff]
    %v82 = vld [vmem:[#allocation2 + $0x8] sm:$0xff]
    %v83 = vld [vmem:[#allocation2 + $0x10] sm:$0xf]
    %v84 = vld [vmem:[#allocation5] sm:$0xff]
    %v85 = vld [vmem:[#allocation5 + $0x8] sm:$0xff]
    %v86 = vld [vmem:[#allocation5 + $0x10] sm:$0xff]
    %v87 = vld [vmem:[#allocation5 + $0x18] sm:$0xff]
    %v88 = vld [vmem:[#allocation5 + $0x20] sm:$0xff]
    %v89 = vld [vmem:[#allocation5 + $0x28] sm:$0xff]
    %v90 = vld [vmem:[#allocation5 + $0x30] sm:$0xff]
    %v91 = vld [vmem:[#allocation5 + $0x38] sm:$0xff]
    %v92 = vld [vmem:[#allocation5 + $0x40] sm:$0xff]
    %v93 = vld [vmem:[#allocation5 + $0x48] sm:$0xff]
    %v94 = vld [vmem:[#allocation5 + $0x50] sm:$0xff]
    %v95 = vld [vmem:[#allocation5 + $0x58] sm:$0xff]
    %v96 = vld [vmem:[#allocation5 + $0x60] sm:$0xff]
    %v97 = vld [vmem:[#allocation5 + $0x68] sm:$0xff]
    %v98 = vld [vmem:[#allocation5 + $0x70] sm:$0xff]
    %v99 = vld [vmem:[#allocation5 + $0x78] sm:$0xff]
    %v100 = vld [vmem:[#allocation5 + $0x80] sm:$0xff]
    %v101 = vld [vmem:[#allocation5 + $0x88] sm:$0xff]
    %v102 = vld [vmem:[#allocation5 + $0x90] sm:$0xff]
    %v103 = vld [vmem:[#allocation5 + $0x98] sm:$0xff]
    %v104 = vld [vmem:[#allocation5 + $0xa0] sm:$0xff]
    %v105 = vld [vmem:[#allocation5 + $0xa8] sm:$0xff]
    %v106 = vld [vmem:[#allocation5 + $0xb0] sm:$0xff]
    %v107 = vld [vmem:[#allocation5 + $0xb8] sm:$0xff]
    %v108 = vld [vmem:[#allocation5 + $0xc0] sm:$0xff]
    %v109 = vld [vmem:[#allocation5 + $0xc8] sm:$0xff]
    %v110 = vld [vmem:[#allocation5 + $0xd0] sm:$0xff]
    %v111 = vld [vmem:[#allocation5 + $0xd8] sm:$0xff]
    %v112 = vld [vmem:[#allocation5 + $0xe0] sm:$0xff]
    %v113 = vld [vmem:[#allocation5 + $0xe8] sm:$0xff]
    %v114 = vld [vmem:[#allocation5 + $0xf0] sm:$0xff]
    %v115 = vld [vmem:[#allocation5 + $0xf8] sm:$0xff]
    %v116 = vld [vmem:[#allocation5 + $0x100] sm:$0xff]
    %v117 = vld [vmem:[#allocation5 + $0x108] sm:$0xff]
    %v118 = vld [vmem:[#allocation5 + $0x110] sm:$0xff]
    %v119 = vld [vmem:[#allocation5 + $0x118] sm:$0xff]
    %v120 = vld [vmem:[#allocation5 + $0x120] sm:$0xff]
    %v121 = vld [vmem:[#allocation5 + $0x128] sm:$0xff]
    %v122 = vld [vmem:[#allocation5 + $0x130] sm:$0xff]
    %v123 = vld [vmem:[#allocation5 + $0x138] sm:$0xff]
    %v124 = vld [vmem:[#allocation5 + $0x140] sm:$0xff]
    %v125 = vld [vmem:[#allocation5 + $0x148] sm:$0xff]
    %v126 = vld [vmem:[#allocation5 + $0x150] sm:$0xff]
    %v127 = vld [vmem:[#allocation5 + $0x158] sm:$0xff]
    %v128 = vld [vmem:[#allocation5 + $0x160] sm:$0xff]
    %v129 = vld [vmem:[#allocation5 + $0x168] sm:$0xff]
    %v130 = vld [vmem:[#allocation5 + $0x170] sm:$0xff]
    %v131 = vld [vmem:[#allocation5 + $0x178] sm:$0xff]
    %v132 = vld [vmem:[#allocation5 + $0x180] sm:$0xff]
    %v133 = vld [vmem:[#allocation5 + $0x188] sm:$0xff]
    %v134 = vld [vmem:[#allocation5 + $0x190] sm:$0xff]
    %v135 = vld [vmem:[#allocation5 + $0x198] sm:$0xff]
    %v136 = vld [vmem:[#allocation5 + $0x1a0] sm:$0xff]
    %v137 = vld [vmem:[#allocation5 + $0x1a8] sm:$0xff]
    %v138 = vld [vmem:[#allocation5 + $0x1b0] sm:$0xff]
    %v139 = vld [vmem:[#allocation5 + $0x1b8] sm:$0xff]
    %v140 = vld [vmem:[#allocation5 + $0x1c0] sm:$0xff]
    %v141 = vld [vmem:[#allocation5 + $0x1c8] sm:$0xff]
    %v142 = vld [vmem:[#allocation5 + $0x1d0] sm:$0xff]
    %v143 = vld [vmem:[#allocation5 + $0x1d8] sm:$0xff]
    %v144 = vld [vmem:[#allocation5 + $0x1e0] sm:$0xff]
    %v145 = vld [vmem:[#allocation5 + $0x1e8] sm:$0xff]
    %v146 = vld [vmem:[#allocation5 + $0x1f0] sm:$0xff]
    %v147 = vld [vmem:[#allocation5 + $0x1f8] sm:$0xff]
    %v148 = vld [vmem:[#allocation5 + $0x200] sm:$0xff]
    %v149 = vld [vmem:[#allocation5 + $0x208] sm:$0xff]
    %v150 = vld [vmem:[#allocation5 + $0x210] sm:$0xff]
    %v151 = vld [vmem:[#allocation5 + $0x218] sm:$0xff]
    %v152 = vld [vmem:[#allocation5 + $0x220] sm:$0xff]
    %v153 = vld [vmem:[#allocation5 + $0x228] sm:$0xff]
    %v154 = vld [vmem:[#allocation5 + $0x230] sm:$0x11]
    %v155 = vld [vmem:[%s2] sm:$0x3]
    %v157 = vlaneseq
    %v158 = vshrl.u32 %v157, 7
    %v159 = vsub.s32 0, %v158
    %v160 = vrot.slane %v155, %v159
    %v161 = vlaneseq
    %v162 = vshrl.u32 %v161, 7
    %v163 = vsub.s32 1, %v162
    %v164 = vrot.slane %v155, %v163
    %v170 = vunpack.c.l.b16 %v81
    %v171 = vunpack.c.h.b16 %v81
    %v172 = vunpack.c.l.b16 %v82
    %v173 = vunpack.c.h.b16 %v82
    %v174 = vunpack.c.l.b16 %v83
    %v175 = vpack.c.b16 %v170, %v170
    %v176 = vpack.c.b16 %v171, %v171
    %v177 = vpack.c.b16 %v172, %v172
    %v178 = vpack.c.b16 %v173, %v173
    %v179 = vpack.c.b16 %v174, %v174
    %v255 = vunpack.c.l.b16 %v84
    %v256 = vunpack.c.h.b16 %v84
    %v257 = vunpack.c.l.b16 %v85
    %v258 = vunpack.c.h.b16 %v85
    %v259 = vunpack.c.l.b16 %v86
    %v260 = vunpack.c.h.b16 %v86
    %v261 = vunpack.c.l.b16 %v87
    %v262 = vunpack.c.h.b16 %v87
    %v263 = vunpack.c.l.b16 %v88
    %v264 = vunpack.c.h.b16 %v88
    %v265 = vunpack.c.l.b16 %v89
    %v266 = vunpack.c.h.b16 %v89
    %v267 = vunpack.c.l.b16 %v90
    %v268 = vunpack.c.h.b16 %v90
    %v269 = vunpack.c.l.b16 %v91
    %v270 = vunpack.c.h.b16 %v91
    %v271 = vunpack.c.l.b16 %v92
    %v272 = vunpack.c.h.b16 %v92
    %v273 = vunpack.c.l.b16 %v93
    %v274 = vunpack.c.h.b16 %v93
    %v275 = vunpack.c.l.b16 %v94
    %v276 = vunpack.c.h.b16 %v94
    %v277 = vunpack.c.l.b16 %v95
    %v278 = vunpack.c.h.b16 %v95
    %v279 = vunpack.c.l.b16 %v96
    %v280 = vunpack.c.h.b16 %v96
    %v281 = vunpack.c.l.b16 %v97
    %v282 = vunpack.c.h.b16 %v97
    %v283 = vunpack.c.l.b16 %v98
    %v284 = vunpack.c.h.b16 %v98
    %v285 = vunpack.c.l.b16 %v99
    %v286 = vunpack.c.h.b16 %v99
    %v287 = vunpack.c.l.b16 %v100
    %v288 = vunpack.c.h.b16 %v100
    %v289 = vunpack.c.l.b16 %v101
    %v290 = vunpack.c.h.b16 %v101
    %v291 = vunpack.c.l.b16 %v102
    %v292 = vunpack.c.h.b16 %v102
    %v293 = vunpack.c.l.b16 %v103
    %v294 = vunpack.c.h.b16 %v103
    %v295 = vunpack.c.l.b16 %v104
    %v296 = vunpack.c.h.b16 %v104
    %v297 = vunpack.c.l.b16 %v105
    %v298 = vunpack.c.h.b16 %v105
    %v299 = vunpack.c.l.b16 %v106
    %v300 = vunpack.c.h.b16 %v106
    %v301 = vunpack.c.l.b16 %v107
    %v302 = vunpack.c.h.b16 %v107
    %v303 = vunpack.c.l.b16 %v108
    %v304 = vunpack.c.h.b16 %v108
    %v305 = vunpack.c.l.b16 %v109
    %v306 = vunpack.c.h.b16 %v109
    %v307 = vunpack.c.l.b16 %v110
    %v308 = vunpack.c.h.b16 %v110
    %v309 = vunpack.c.l.b16 %v111
    %v310 = vunpack.c.h.b16 %v111
    %v311 = vunpack.c.l.b16 %v112
    %v312 = vunpack.c.h.b16 %v112
    %v313 = vunpack.c.l.b16 %v113
    %v314 = vunpack.c.h.b16 %v113
    %v315 = vunpack.c.l.b16 %v114
    %v316 = vunpack.c.h.b16 %v114
    %v317 = vunpack.c.l.b16 %v115
    %v318 = vunpack.c.h.b16 %v115
    %v319 = vunpack.c.l.b16 %v116
    %v320 = vunpack.c.h.b16 %v116
    %v321 = vunpack.c.l.b16 %v117
    %v322 = vunpack.c.h.b16 %v117
    %v323 = vunpack.c.l.b16 %v118
    %v324 = vunpack.c.h.b16 %v118
    %v325 = vunpack.c.l.b16 %v119
    %v326 = vunpack.c.h.b16 %v119
    %v327 = vunpack.c.l.b16 %v120
    %v328 = vunpack.c.h.b16 %v120
    %v329 = vunpack.c.l.b16 %v121
    %v330 = vunpack.c.h.b16 %v121
    %v331 = vunpack.c.l.b16 %v122
    %v332 = vunpack.c.h.b16 %v122
    %v333 = vunpack.c.l.b16 %v123
    %v334 = vunpack.c.h.b16 %v123
    %v335 = vunpack.c.l.b16 %v124
    %v336 = vunpack.c.h.b16 %v124
    %v337 = vunpack.c.l.b16 %v125
    %v338 = vunpack.c.h.b16 %v125
    %v339 = vunpack.c.l.b16 %v126
    %v340 = vunpack.c.h.b16 %v126
    %v341 = vunpack.c.l.b16 %v127
    %v342 = vunpack.c.h.b16 %v127
    %v343 = vunpack.c.l.b16 %v128
    %v344 = vunpack.c.h.b16 %v128
    %v345 = vunpack.c.l.b16 %v129
    %v346 = vunpack.c.h.b16 %v129
    %v347 = vunpack.c.l.b16 %v130
    %v348 = vunpack.c.h.b16 %v130
    %v349 = vunpack.c.l.b16 %v131
    %v350 = vunpack.c.h.b16 %v131
    %v351 = vunpack.c.l.b16 %v132
    %v352 = vunpack.c.h.b16 %v132
    %v353 = vunpack.c.l.b16 %v133
    %v354 = vunpack.c.h.b16 %v133
    %v355 = vunpack.c.l.b16 %v134
    %v356 = vunpack.c.h.b16 %v134
    %v357 = vunpack.c.l.b16 %v135
    %v358 = vunpack.c.h.b16 %v135
    %v359 = vunpack.c.l.b16 %v136
    %v360 = vunpack.c.h.b16 %v136
    %v361 = vunpack.c.l.b16 %v137
    %v362 = vunpack.c.h.b16 %v137
    %v363 = vunpack.c.l.b16 %v138
    %v364 = vunpack.c.h.b16 %v138
    %v365 = vunpack.c.l.b16 %v139
    %v366 = vunpack.c.h.b16 %v139
    %v367 = vunpack.c.l.b16 %v140
    %v368 = vunpack.c.h.b16 %v140
    %v369 = vunpack.c.l.b16 %v141
    %v370 = vunpack.c.h.b16 %v141
    %v371 = vunpack.c.l.b16 %v142
    %v372 = vunpack.c.h.b16 %v142
    %v373 = vunpack.c.l.b16 %v143
    %v374 = vunpack.c.h.b16 %v143
    %v375 = vunpack.c.l.b16 %v144
    %v376 = vunpack.c.h.b16 %v144
    %v377 = vunpack.c.l.b16 %v145
    %v378 = vunpack.c.h.b16 %v145
    %v379 = vunpack.c.l.b16 %v146
    %v380 = vunpack.c.h.b16 %v146
    %v381 = vunpack.c.l.b16 %v147
    %v382 = vunpack.c.h.b16 %v147
    %v383 = vunpack.c.l.b16 %v148
    %v384 = vunpack.c.h.b16 %v148
    %v385 = vunpack.c.l.b16 %v149
    %v386 = vunpack.c.h.b16 %v149
    %v387 = vunpack.c.l.b16 %v150
    %v388 = vunpack.c.h.b16 %v150
    %v389 = vunpack.c.l.b16 %v151
    %v390 = vunpack.c.h.b16 %v151
    %v391 = vunpack.c.l.b16 %v152
    %v392 = vunpack.c.h.b16 %v152
    %v393 = vunpack.c.l.b16 %v153
    %v394 = vunpack.c.h.b16 %v153
    %v395 = vunpack.c.l.b16 %v154
    %v396 = vunpack.c.h.b16 %v154
    %v397 = vpack.c.b16 %v257, %v255
    %v398 = vpack.c.b16 %v258, %v256
    %v399 = vpack.c.b16 %v261, %v259
    %v400 = vpack.c.b16 %v262, %v260
    %v401 = vpack.c.b16 %v265, %v263
    %v402 = vpack.c.b16 %v266, %v264
    %v403 = vpack.c.b16 %v269, %v267
    %v404 = vpack.c.b16 %v270, %v268
    %v405 = vpack.c.b16 %v273, %v271
    %v406 = vpack.c.b16 %v274, %v272
    %v407 = vpack.c.b16 %v277, %v275
    %v408 = vpack.c.b16 %v278, %v276
    %v409 = vpack.c.b16 %v281, %v279
    %v410 = vpack.c.b16 %v282, %v280
    %v411 = vpack.c.b16 %v285, %v283
    %v412 = vpack.c.b16 %v286, %v284
    %v413 = vpack.c.b16 %v289, %v287
    %v414 = vpack.c.b16 %v290, %v288
    %v415 = vpack.c.b16 %v293, %v291
    %v416 = vpack.c.b16 %v294, %v292
    %v417 = vpack.c.b16 %v297, %v295
    %v418 = vpack.c.b16 %v298, %v296
    %v419 = vpack.c.b16 %v301, %v299
    %v420 = vpack.c.b16 %v302, %v300
    %v421 = vpack.c.b16 %v305, %v303
    %v422 = vpack.c.b16 %v306, %v304
    %v423 = vpack.c.b16 %v309, %v307
    %v424 = vpack.c.b16 %v310, %v308
    %v425 = vpack.c.b16 %v313, %v311
    %v426 = vpack.c.b16 %v314, %v312
    %v427 = vpack.c.b16 %v317, %v315
    %v428 = vpack.c.b16 %v318, %v316
    %v429 = vpack.c.b16 %v321, %v319
    %v430 = vpack.c.b16 %v322, %v320
    %v431 = vpack.c.b16 %v325, %v323
    %v432 = vpack.c.b16 %v326, %v324
    %v433 = vpack.c.b16 %v329, %v327
    %v434 = vpack.c.b16 %v330, %v328
    %v435 = vpack.c.b16 %v333, %v331
    %v436 = vpack.c.b16 %v334, %v332
    %v437 = vpack.c.b16 %v337, %v335
    %v438 = vpack.c.b16 %v338, %v336
    %v439 = vpack.c.b16 %v341, %v339
    %v440 = vpack.c.b16 %v342, %v340
    %v441 = vpack.c.b16 %v345, %v343
    %v442 = vpack.c.b16 %v346, %v344
    %v443 = vpack.c.b16 %v349, %v347
    %v444 = vpack.c.b16 %v350, %v348
    %v445 = vpack.c.b16 %v353, %v351
    %v446 = vpack.c.b16 %v354, %v352
    %v447 = vpack.c.b16 %v357, %v355
    %v448 = vpack.c.b16 %v358, %v356
    %v449 = vpack.c.b16 %v361, %v359
    %v450 = vpack.c.b16 %v362, %v360
    %v451 = vpack.c.b16 %v365, %v363
    %v452 = vpack.c.b16 %v366, %v364
    %v453 = vpack.c.b16 %v369, %v367
    %v454 = vpack.c.b16 %v370, %v368
    %v455 = vpack.c.b16 %v373, %v371
    %v456 = vpack.c.b16 %v374, %v372
    %v457 = vpack.c.b16 %v377, %v375
    %v458 = vpack.c.b16 %v378, %v376
    %v459 = vpack.c.b16 %v381, %v379
    %v460 = vpack.c.b16 %v382, %v380
    %v461 = vpack.c.b16 %v385, %v383
    %v462 = vpack.c.b16 %v386, %v384
    %v463 = vpack.c.b16 %v389, %v387
    %v464 = vpack.c.b16 %v390, %v388
    %v465 = vpack.c.b16 %v393, %v391
    %v466 = vpack.c.b16 %v394, %v392
    %v467 = vpack.c.b16 %v395, %v395
    %v468 = vpack.c.b16 %v396, %v396
    %vm539 = vcmask 400384
    %v541 = vsel %vm539, %v179, 0
    %vm543 = vcmask 1040384
    %v544 = vsel 0, 4294967295, 65535
    %v545 = vsel %vm543, %v544, 0
    %v547 = vand.u32 %v467, %v545
    %v550 = vand.u32 %v468, %v545
    %552 = vmatprep.subr.bf16.mxu0 %v398
    %553 = vmatpush1.bf16.msra.mxu0 %v397
    %554 = vmatprep.subr.bf16.mxu0 %v400
    %555 = vmatpush1.bf16.msra.mxu0 %v399
    %556 = vmatprep.subr.bf16.mxu0 %v402
    %557 = vmatpush1.bf16.msra.mxu0 %v401
    %558 = vmatprep.subr.bf16.mxu0 %v404
    %559 = vmatpush1.bf16.msra.mxu0 %v403
    %560 = vmatprep.subr.bf16.mxu0 %v406
    %561 = vmatpush1.bf16.msra.mxu0 %v405
    %562 = vmatprep.subr.bf16.mxu0 %v408
    %563 = vmatpush1.bf16.msra.mxu0 %v407
    %564 = vmatprep.subr.bf16.mxu0 %v410
    %565 = vmatpush1.bf16.msra.mxu0 %v409
    %566 = vmatprep.subr.bf16.mxu0 %v412
    %567 = vmatpush1.bf16.msra.mxu0 %v411
    %568 = vmatprep.subr.bf16.mxu0 %v414
    %569 = vmatpush1.bf16.msra.mxu0 %v413
    %570 = vmatprep.subr.bf16.mxu0 %v416
    %571 = vmatpush1.bf16.msra.mxu0 %v415
    %572 = vmatprep.subr.bf16.mxu0 %v418
    %573 = vmatpush1.bf16.msra.mxu0 %v417
    %574 = vmatprep.subr.bf16.mxu0 %v420
    %575 = vmatpush1.bf16.msra.mxu0 %v419
    %576 = vmatprep.subr.bf16.mxu0 %v422
    %577 = vmatpush1.bf16.msra.mxu0 %v421
    %578 = vmatprep.subr.bf16.mxu0 %v424
    %579 = vmatpush1.bf16.msra.mxu0 %v423
    %580 = vmatprep.subr.bf16.mxu0 %v426
    %581 = vmatpush1.bf16.msra.mxu0 %v425
    %582 = vmatprep.subr.bf16.mxu0 %v428
    %583 = vmatpush1.bf16.msra.mxu0 %v427
    %584 = vmatprep.mubr.bf16.mxu0 %v176
    %585 = vmatmul.mubr.bf16.gmra.mrb[0].mxu0 %v175
    %v586 = vpop.f32.mrb[0].mxu0
    %v587 = vadd.f32 %v160, %v586
    %v588 = vpop.f32.mrb[0].mxu0
    %v589 = vadd.f32 %v164, %v588
    %v590 = vpop.f32.mrb[0].mxu0
    %v591 = vpop.f32.mrb[0].mxu0
    %592 = vdwg.mxu0
    %593 = vmatprep.subr.bf16.mxu0 %v430
    %594 = vmatpush1.bf16.msra.mxu0 %v429
    %595 = vmatprep.subr.bf16.mxu0 %v432
    %596 = vmatpush1.bf16.msra.mxu0 %v431
    %597 = vmatprep.subr.bf16.mxu0 %v434
    %598 = vmatpush1.bf16.msra.mxu0 %v433
    %599 = vmatprep.subr.bf16.mxu0 %v436
    %600 = vmatpush1.bf16.msra.mxu0 %v435
    %601 = vmatprep.subr.bf16.mxu0 %v438
    %602 = vmatpush1.bf16.msra.mxu0 %v437
    %603 = vmatprep.subr.bf16.mxu0 %v440
    %604 = vmatpush1.bf16.msra.mxu0 %v439
    %605 = vmatprep.subr.bf16.mxu0 %v442
    %606 = vmatpush1.bf16.msra.mxu0 %v441
    %607 = vmatprep.subr.bf16.mxu0 %v444
    %608 = vmatpush1.bf16.msra.mxu0 %v443
    %609 = vmatprep.subr.bf16.mxu0 %v446
    %610 = vmatpush1.bf16.msra.mxu0 %v445
    %611 = vmatprep.subr.bf16.mxu0 %v448
    %612 = vmatpush1.bf16.msra.mxu0 %v447
    %613 = vmatprep.subr.bf16.mxu0 %v450
    %614 = vmatpush1.bf16.msra.mxu0 %v449
    %615 = vmatprep.subr.bf16.mxu0 %v452
    %616 = vmatpush1.bf16.msra.mxu0 %v451
    %617 = vmatprep.subr.bf16.mxu0 %v454
    %618 = vmatpush1.bf16.msra.mxu0 %v453
    %619 = vmatprep.subr.bf16.mxu0 %v456
    %620 = vmatpush1.bf16.msra.mxu0 %v455
    %621 = vmatprep.subr.bf16.mxu0 %v458
    %622 = vmatpush1.bf16.msra.mxu0 %v457
    %623 = vmatprep.subr.bf16.mxu0 %v460
    %624 = vmatpush1.bf16.msra.mxu0 %v459
    %625 = vmatprep.mubr.bf16.mxu0 %v178
    %626 = vmatmul.mubr.bf16.gmra.mrb[0].mxu0 %v177
    %v627 = vpop.f32.mrb[0].mxu0
    %v628 = vadd.f32 %v587, %v627
    %v629 = vpop.f32.mrb[0].mxu0
    %v630 = vadd.f32 %v589, %v629
    %v631 = vpop.f32.mrb[0].mxu0
    %v632 = vpop.f32.mrb[0].mxu0
    %633 = vdwg.mxu0
    %634 = vmatprep.subr.bf16.mxu0 %v462
    %635 = vmatpush1.bf16.msra.mxu0 %v461
    %636 = vmatprep.subr.bf16.mxu0 %v464
    %637 = vmatpush1.bf16.msra.mxu0 %v463
    %638 = vmatprep.subr.bf16.mxu0 %v466
    %639 = vmatpush1.bf16.msra.mxu0 %v465
    %640 = vmatprep.subr.bf16.mxu0 %v550
    %641 = vmatpush1.bf16.msra.mxu0 %v547
    %642 = vmatprep.subr.bf16.mxu0 0
    %643 = vmatpush1.bf16.msra.mxu0 0
    %644 = vmatprep.subr.bf16.mxu0 0
    %645 = vmatpush1.bf16.msra.mxu0 0
    %646 = vmatprep.subr.bf16.mxu0 0
    %647 = vmatpush1.bf16.msra.mxu0 0
    %648 = vmatprep.subr.bf16.mxu0 0
    %649 = vmatpush1.bf16.msra.mxu0 0
    %650 = vmatprep.subr.bf16.mxu0 0
    %651 = vmatpush1.bf16.msra.mxu0 0
    %652 = vmatprep.subr.bf16.mxu0 0
    %653 = vmatpush1.bf16.msra.mxu0 0
    %654 = vmatprep.subr.bf16.mxu0 0
    %655 = vmatpush1.bf16.msra.mxu0 0
    %656 = vmatprep.subr.bf16.mxu0 0
    %657 = vmatpush1.bf16.msra.mxu0 0
    %658 = vmatprep.subr.bf16.mxu0 0
    %659 = vmatpush1.bf16.msra.mxu0 0
    %660 = vmatprep.subr.bf16.mxu0 0
    %661 = vmatpush1.bf16.msra.mxu0 0
    %662 = vmatprep.subr.bf16.mxu0 0
    %663 = vmatpush1.bf16.msra.mxu0 0
    %664 = vmatprep.subr.bf16.mxu0 0
    %665 = vmatpush1.bf16.msra.mxu0 0
    %666 = vmatprep.mubr.bf16.mxu0 0
    %667 = vmatmul.mubr.bf16.gmra.mrb[0].mxu0 %v541
    %v668 = vpop.f32.mrb[0].mxu0
    %v669 = vadd.f32 %v628, %v668
    %v670 = vpop.f32.mrb[0].mxu0
    %v671 = vadd.f32 %v630, %v670
    %v672 = vpop.f32.mrb[0].mxu0
    %v673 = vpop.f32.mrb[0].mxu0
    %674 = vdwg.mxu0
    %v675 = vmax.f32 %v669, 0.0
    %v676 = vmax.f32 %v671, 0.0
    %v677 = vpack.c.bf16 %v675, %v675
    %v678 = vpack.c.bf16 %v676, %v676
    %v679 = vld [vmem:[#allocation7] sm:$0xf]
    %v680 = vld [vmem:[#allocation7 + $0x4] sm:$0xf]
    %v681 = vld [vmem:[#allocation7 + $0x8] sm:$0xf]
    %v682 = vld [vmem:[#allocation7 + $0xc] sm:$0xf]
    %v683 = vld [vmem:[#allocation7 + $0x10] sm:$0xf]
    %v684 = vld [vmem:[#allocation7 + $0x14] sm:$0xf]
    %v685 = vld [vmem:[#allocation7 + $0x18] sm:$0xf]
    %v686 = vld [vmem:[#allocation7 + $0x1c] sm:$0xf]
    %v687 = vld [vmem:[#allocation7 + $0x20] sm:$0xf]
    %v688 = vld [vmem:[#allocation7 + $0x24] sm:$0xf]
    %v689 = vld [vmem:[#allocation7 + $0x28] sm:$0xf]
    %v690 = vld [vmem:[#allocation7 + $0x2c] sm:$0xf]
    %v691 = vld [vmem:[#allocation7 + $0x30] sm:$0xf]
    %v692 = vld [vmem:[#allocation7 + $0x34] sm:$0xf]
    %v693 = vld [vmem:[#allocation7 + $0x38] sm:$0xf]
    %v694 = vld [vmem:[#allocation7 + $0x3c] sm:$0xf]
    %v695 = vld [vmem:[#allocation7 + $0x40] sm:$0xf]
    %v696 = vld [vmem:[#allocation7 + $0x44] sm:$0xf]
    %v697 = vld [vmem:[#allocation7 + $0x48] sm:$0xf]
    %v698 = vld [vmem:[#allocation7 + $0x4c] sm:$0xf]
    %v699 = vld [vmem:[#allocation7 + $0x50] sm:$0xf]
    %v700 = vld [vmem:[#allocation7 + $0x54] sm:$0xf]
    %v701 = vld [vmem:[#allocation7 + $0x58] sm:$0xf]
    %v702 = vld [vmem:[#allocation7 + $0x5c] sm:$0xf]
    %v703 = vld [vmem:[#allocation7 + $0x60] sm:$0xf]
    %v704 = vld [vmem:[#allocation7 + $0x64] sm:$0xf]
    %v705 = vld [vmem:[#allocation7 + $0x68] sm:$0xf]
    %v706 = vld [vmem:[#allocation7 + $0x6c] sm:$0xf]
    %v707 = vld [vmem:[#allocation7 + $0x70] sm:$0xf]
    %v708 = vld [vmem:[#allocation7 + $0x74] sm:$0xf]
    %v709 = vld [vmem:[#allocation7 + $0x78] sm:$0xf]
    %v710 = vld [vmem:[#allocation7 + $0x7c] sm:$0xf]
    %v711 = vld [vmem:[%s4] sm:$0x1]
    %v713 = vlaneseq
    %v714 = vshrl.u32 %v713, 7
    %v715 = vsub.s32 0, %v714
    %v716 = vrot.slane %v711, %v715
    %v750 = vunpack.c.l.b16 %v679
    %v751 = vunpack.c.l.b16 %v680
    %v752 = vunpack.c.l.b16 %v681
    %v753 = vunpack.c.l.b16 %v682
    %v754 = vunpack.c.l.b16 %v683
    %v755 = vunpack.c.l.b16 %v684
    %v756 = vunpack.c.l.b16 %v685
    %v757 = vunpack.c.l.b16 %v686
    %v758 = vunpack.c.l.b16 %v687
    %v759 = vunpack.c.l.b16 %v688
    %v760 = vunpack.c.l.b16 %v689
    %v761 = vunpack.c.l.b16 %v690
    %v762 = vunpack.c.l.b16 %v691
    %v763 = vunpack.c.l.b16 %v692
    %v764 = vunpack.c.l.b16 %v693
    %v765 = vunpack.c.l.b16 %v694
    %v766 = vunpack.c.l.b16 %v695
    %v767 = vunpack.c.l.b16 %v696
    %v768 = vunpack.c.l.b16 %v697
    %v769 = vunpack.c.l.b16 %v698
    %v770 = vunpack.c.l.b16 %v699
    %v771 = vunpack.c.l.b16 %v700
    %v772 = vunpack.c.l.b16 %v701
    %v773 = vunpack.c.l.b16 %v702
    %v774 = vunpack.c.l.b16 %v703
    %v775 = vunpack.c.l.b16 %v704
    %v776 = vunpack.c.l.b16 %v705
    %v777 = vunpack.c.l.b16 %v706
    %v778 = vunpack.c.l.b16 %v707
    %v779 = vunpack.c.l.b16 %v708
    %v780 = vunpack.c.l.b16 %v709
    %v781 = vunpack.c.l.b16 %v710
    %v782 = vpack.c.b16 %v751, %v750
    %v783 = vpack.c.b16 %v753, %v752
    %v784 = vpack.c.b16 %v755, %v754
    %v785 = vpack.c.b16 %v757, %v756
    %v786 = vpack.c.b16 %v759, %v758
    %v787 = vpack.c.b16 %v761, %v760
    %v788 = vpack.c.b16 %v763, %v762
    %v789 = vpack.c.b16 %v765, %v764
    %v790 = vpack.c.b16 %v767, %v766
    %v791 = vpack.c.b16 %v769, %v768
    %v792 = vpack.c.b16 %v771, %v770
    %v793 = vpack.c.b16 %v773, %v772
    %v794 = vpack.c.b16 %v775, %v774
    %v795 = vpack.c.b16 %v777, %v776
    %v796 = vpack.c.b16 %v779, %v778
    %v797 = vpack.c.b16 %v781, %v780
    %814 = vmatprep.subr.bf16.mxu0 0
    %815 = vmatpush1.bf16.msra.mxu0 %v782
    %816 = vmatprep.subr.bf16.mxu0 0
    %817 = vmatpush1.bf16.msra.mxu0 %v783
    %818 = vmatprep.subr.bf16.mxu0 0
    %819 = vmatpush1.bf16.msra.mxu0 %v784
    %820 = vmatprep.subr.bf16.mxu0 0
    %821 = vmatpush1.bf16.msra.mxu0 %v785
    %822 = vmatprep.subr.bf16.mxu0 0
    %823 = vmatpush1.bf16.msra.mxu0 %v786
    %824 = vmatprep.subr.bf16.mxu0 0
    %825 = vmatpush1.bf16.msra.mxu0 %v787
    %826 = vmatprep.subr.bf16.mxu0 0
    %827 = vmatpush1.bf16.msra.mxu0 %v788
    %828 = vmatprep.subr.bf16.mxu0 0
    %829 = vmatpush1.bf16.msra.mxu0 %v789
    %830 = vmatprep.subr.bf16.mxu0 0
    %831 = vmatpush1.bf16.msra.mxu0 %v790
    %832 = vmatprep.subr.bf16.mxu0 0
    %833 = vmatpush1.bf16.msra.mxu0 %v791
    %834 = vmatprep.subr.bf16.mxu0 0
    %835 = vmatpush1.bf16.msra.mxu0 %v792
    %836 = vmatprep.subr.bf16.mxu0 0
    %837 = vmatpush1.bf16.msra.mxu0 %v793
    %838 = vmatprep.subr.bf16.mxu0 0
    %839 = vmatpush1.bf16.msra.mxu0 %v794
    %840 = vmatprep.subr.bf16.mxu0 0
    %841 = vmatpush1.bf16.msra.mxu0 %v795
    %842 = vmatprep.subr.bf16.mxu0 0
    %843 = vmatpush1.bf16.msra.mxu0 %v796
    %844 = vmatprep.subr.bf16.mxu0 0
    %845 = vmatpush1.bf16.msra.mxu0 %v797
    %846 = vmatprep.mubr.bf16.mxu0 %v678
    %847 = vmatmul.mubr.bf16.gmra.mrb[0].mxu0 %v677
    %v848 = vpop.f32.mrb[0].mxu0
    %v849 = vadd.f32 %v716, %v848
    %v850 = vpop.f32.mrb[0].mxu0
    %v851 = vpop.f32.mrb[0].mxu0
    %v852 = vpop.f32.mrb[0].mxu0
    %853 = vdwg.mxu0
    %v854 = vmax.f32 %v849, 0.0
    %v855 = vpack.c.bf16 %v854, %v854
    %v856 = vld [vmem:[#allocation8] sm:$0xf]
    %v857 = vld [vmem:[#allocation8 + $0x4] sm:$0xf]
    %v858 = vld [vmem:[#allocation8 + $0x8] sm:$0xf]
    %v859 = vld [vmem:[#allocation8 + $0xc] sm:$0xf]
    %v860 = vld [vmem:[#allocation8 + $0x10] sm:$0xf]
    %v861 = vld [vmem:[#allocation8 + $0x14] sm:$0xf]
    %v862 = vld [vmem:[#allocation8 + $0x18] sm:$0xf]
    %v863 = vld [vmem:[#allocation8 + $0x1c] sm:$0xf]
    %v864 = vld [vmem:[#allocation8 + $0x20] sm:$0xf]
    %v865 = vld [vmem:[#allocation8 + $0x24] sm:$0xf]
    %v866 = vld [vmem:[#allocation8 + $0x28] sm:$0xf]
    %v867 = vld [vmem:[#allocation8 + $0x2c] sm:$0xf]
    %v868 = vld [vmem:[#allocation8 + $0x30] sm:$0xf]
    %v869 = vld [vmem:[#allocation8 + $0x34] sm:$0xf]
    %v870 = vld [vmem:[#allocation8 + $0x38] sm:$0xf]
    %v871 = vld [vmem:[#allocation8 + $0x3c] sm:$0xf]
    %v872 = vld [vmem:[%s6] sm:$0x1]
    %v874 = vlaneseq
    %v875 = vshrl.u32 %v874, 7
    %v876 = vsub.s32 0, %v875
    %v877 = vrot.slane %v872, %v876
    %v895 = vunpack.c.l.b16 %v856
    %v896 = vunpack.c.l.b16 %v857
    %v897 = vunpack.c.l.b16 %v858
    %v898 = vunpack.c.l.b16 %v859
    %v899 = vunpack.c.l.b16 %v860
    %v900 = vunpack.c.l.b16 %v861
    %v901 = vunpack.c.l.b16 %v862
    %v902 = vunpack.c.l.b16 %v863
    %v903 = vunpack.c.l.b16 %v864
    %v904 = vunpack.c.l.b16 %v865
    %v905 = vunpack.c.l.b16 %v866
    %v906 = vunpack.c.l.b16 %v867
    %v907 = vunpack.c.l.b16 %v868
    %v908 = vunpack.c.l.b16 %v869
    %v909 = vunpack.c.l.b16 %v870
    %v910 = vunpack.c.l.b16 %v871
    %v911 = vpack.c.b16 %v896, %v895
    %v912 = vpack.c.b16 %v898, %v897
    %v913 = vpack.c.b16 %v900, %v899
    %v914 = vpack.c.b16 %v902, %v901
    %v915 = vpack.c.b16 %v904, %v903
    %v916 = vpack.c.b16 %v906, %v905
    %v917 = vpack.c.b16 %v908, %v907
    %v918 = vpack.c.b16 %v910, %v909
    %927 = vmatprep.subr.bf16.mxu0 0
    %928 = vmatpush1.bf16.msra.mxu0 %v911
    %929 = vmatprep.subr.bf16.mxu0 0
    %930 = vmatpush1.bf16.msra.mxu0 %v912
    %931 = vmatprep.subr.bf16.mxu0 0
    %932 = vmatpush1.bf16.msra.mxu0 %v913
    %933 = vmatprep.subr.bf16.mxu0 0
    %934 = vmatpush1.bf16.msra.mxu0 %v914
    %935 = vmatprep.subr.bf16.mxu0 0
    %936 = vmatpush1.bf16.msra.mxu0 %v915
    %937 = vmatprep.subr.bf16.mxu0 0
    %938 = vmatpush1.bf16.msra.mxu0 %v916
    %939 = vmatprep.subr.bf16.mxu0 0
    %940 = vmatpush1.bf16.msra.mxu0 %v917
    %941 = vmatprep.subr.bf16.mxu0 0
    %942 = vmatpush1.bf16.msra.mxu0 %v918
    %943 = vmatprep.subr.bf16.mxu0 0
    %944 = vmatpush1.bf16.msra.mxu0 0
    %945 = vmatprep.subr.bf16.mxu0 0
    %946 = vmatpush1.bf16.msra.mxu0 0
    %947 = vmatprep.subr.bf16.mxu0 0
    %948 = vmatpush1.bf16.msra.mxu0 0
    %949 = vmatprep.subr.bf16.mxu0 0
    %950 = vmatpush1.bf16.msra.mxu0 0
    %951 = vmatprep.subr.bf16.mxu0 0
    %952 = vmatpush1.bf16.msra.mxu0 0
    %953 = vmatprep.subr.bf16.mxu0 0
    %954 = vmatpush1.bf16.msra.mxu0 0
    %955 = vmatprep.subr.bf16.mxu0 0
    %956 = vmatpush1.bf16.msra.mxu0 0
    %957 = vmatprep.subr.bf16.mxu0 0
    %958 = vmatpush1.bf16.msra.mxu0 0
    %959 = vmatprep.mubr.bf16.mxu0 0
    %960 = vmatmul.mubr.bf16.gmra.mrb[0].mxu0 %v855
    %v961 = vpop.f32.mrb[0].mxu0
    %v962 = vadd.f32 %v877, %v961
    %v963 = vpop.f32.mrb[0].mxu0
    %v964 = vpop.f32.mrb[0].mxu0
    %v965 = vpop.f32.mrb[0].mxu0
    %966 = vdwg.mxu0
    %967 = vst [vmem:[#allocation10] sm:$0xff] %v962
    // Predicated region
    $region46: #{tpu_custom_call.1} parent=1 // pred_check
      _
    $region47: #{tpu_custom_call.1} parent=1 // pred_check_branch
      %969 = sbr.rel (0) target = $region49
    $region48: #{tpu_custom_call.1} parent=1 // pred_region
      %s971 = ssub.s32 128, 128
      %972 = vsyncadd [#allocation4], %s971
      %s974 = sshll.u32 [#allocation10], 4
      %s975 = int_to_ptr.vmem [resolvable:$true] %s974
      %977 = dma.vmem_to_hbm [thread:$0]  %s975, 128, %s7, [#allocation4]
    $region49: #{tpu_custom_call.1} parent=1 // pred_fallthru
      _
    // Predicated region
    $region50: #{tpu_custom_call.1} parent=1 // pred_check
      _
    $region51: #{tpu_custom_call.1} parent=1 // pred_check_branch
      %979 = sbr.rel (0) target = $region53
    $region52: #{tpu_custom_call.1} parent=1 // pred_region
      %980 = dma.done [#allocation4], 128
    $region53: #{tpu_custom_call.1} parent=1 // pred_fallthru
      _
    %981 = vsyncpa [#allocation3], 1
    %982 = vsyncpa [#allocation6], 1
    %983 = vsyncpa [#allocation9], 1
    %984 = vsyncpa [#allocation4], 1

</llo_original>
